<compile_context>
chip_gen: v7x
topology: tpu7x:2x2x1
jax: 0.10.0
libtpu: 0.0.40
codegen_flags: <defaults>
</compile_context>

<pallas_src>
import jax
import jax.numpy as jnp
from jax.experimental import pallas as pl
from jax.experimental.pallas import tpu as pltpu


# ----------------------------------------------------------------------------
# Helpers
# ----------------------------------------------------------------------------
def _round_up(x, m):
    return ((x + m - 1) // m) * m


# ----------------------------------------------------------------------------
# Fused Pallas kernel: all Gaussian layers + final linear, one lane tile.
# ----------------------------------------------------------------------------
def _make_fused_garf_kernel(num_layers, neg_inv_two_sigma_sq):
    """num_layers includes the final (plain) linear layer."""

    def kernel(xT_ref, *refs):
        # refs = (w0, b0, w1, b1, ..., w_{L-1}, b_{L-1}, oT_ref)
        # W_i: (out_i, in_i)  (PyTorch layout),  b_i: (out_i, 1)
        oT_ref = refs[-1]
        wb = refs[:-1]

        # Feature-major activations: (features, tile_n), batch on lanes.
        h = xT_ref[...].astype(jnp.float32)

        # Static (unrolled) layer loop: layer count is a compile-time constant.
        for li in range(num_layers - 1):
            w = wb[2 * li][...]                          # (out, in)
            b = wb[2 * li + 1][...]                      # (out, 1) lane-broadcast
            y = jnp.dot(w, h, preferred_element_type=jnp.float32) + b
            # Gaussian activation: exp(-y^2 / (2 sigma^2)) as mul + mul + EUP exp.
            h = jnp.exp((y * y) * neg_inv_two_sigma_sq)

        # Final plain linear layer; output stays feature-major (out_dims, tile_n).
        w = wb[-2][...]
        b = wb[-1][...]
        y = jnp.dot(w, h, preferred_element_type=jnp.float32) + b
        oT_ref[...] = y.astype(oT_ref.dtype)

    return kernel


def garf_forward(params, x, *, sigma=0.1, tile_n=8192):
    """Fused Garf forward.

    params = [(W, b), ...] with W: (fan_out, fan_in) and b: (fan_out, 1).
    x: (N, in_dims) float32.  Returns (N, out_dims) float32.
    """
    n, in_dims = x.shape
    num_layers = len(params)
    out_dims = params[-1][0].shape[0]

    # Feature-major: batch on lanes.  One small wrapper transpose in / out
    # (12 + 16 bytes/row) buys lane-dense exp/VPU work and an unpadded output.
    xT = x.astype(jnp.float32).T                         # (in_dims, N)

    # Lane tile: multiple of 128; capped so the grid has >= 2 steps whenever
    # possible (v7x megacore sharding of the "parallel" axis).
    tn = min(int(tile_n), _round_up(pl.cdiv(max(n, 1), 2), 128))
    tn = max(128, _round_up(tn, 128))
    if tn >= n:
        tn = n                       # single full-extent block (always legal)
    grid = (pl.cdiv(n, tn),)

    # ---- flatten params and build specs (weights grid-invariant -> resident) ----
    flat_params = []
    param_specs = []
    for w, b in params:
        flat_params.extend([w, b])
        param_specs.append(pl.BlockSpec(w.shape, lambda i: (0, 0)))
        param_specs.append(pl.BlockSpec(b.shape, lambda i: (0, 0)))

    in_specs = [pl.BlockSpec((in_dims, tn), lambda i: (0, i))] + param_specs
    out_specs = pl.BlockSpec((out_dims, tn), lambda i: (0, i))

    # ---- advisory cost estimate for the XLA scheduler ----
    flops = 2 * n * sum(int(w.shape[0]) * int(w.shape[1]) for w, _ in params)
    transcendentals = n * sum(int(w.shape[0]) for w, _ in params[:-1])
    bytes_accessed = (
        xT.size * xT.dtype.itemsize
        + n * out_dims * 4
        + sum(int(a.size) * a.dtype.itemsize for a in flat_params)
    )
    cost = pl.CostEstimate(
        flops=flops, transcendentals=transcendentals, bytes_accessed=bytes_accessed
    )

    neg_inv_two_sigma_sq = -1.0 / (2.0 * float(sigma) * float(sigma))
    kernel = _make_fused_garf_kernel(num_layers, neg_inv_two_sigma_sq)

    outT = pl.pallas_call(
        kernel,
        out_shape=jax.ShapeDtypeStruct((out_dims, n), jnp.float32),
        grid=grid,
        in_specs=in_specs,
        out_specs=out_specs,
        compiler_params=pltpu.CompilerParams(
            dimension_semantics=("parallel",),      # megacore-shardable on v7x
            vmem_limit_bytes=32 * 1024 * 1024,
        ),
        cost_estimate=cost,
    )(xT, *flat_params)

    return outT.T                                     # (N, out_dims)


# ----------------------------------------------------------------------------
# Parameter init (deterministic, mimics nn.Linear default uniform +-1/sqrt(fan_in))
# Weights stored as (fan_out, fan_in) -- the PyTorch nn.Linear layout.
# ----------------------------------------------------------------------------
def init_garf_params(key, in_dims, hidden_dims, hidden_layers, out_dims):
    dims = [in_dims] + [hidden_dims] * (hidden_layers + 1) + [out_dims]
    params = []
    for fan_in, fan_out in zip(dims[:-1], dims[1:]):
        key, kw, kb = jax.random.split(key, 3)
        bound = 1.0 / jnp.sqrt(jnp.float32(fan_in))
        w = jax.random.uniform(kw, (fan_out, fan_in), jnp.float32, -bound, bound)
        b = jax.random.uniform(kb, (fan_out, 1), jnp.float32, -bound, bound)
        params.append((w, b))
    return params


# ----------------------------------------------------------------------------
# Reference (plain JAX, f32-exact matmuls) for sanity checking
# ----------------------------------------------------------------------------
def garf_reference(params, x, *, sigma=0.1):
    hp = jax.lax.Precision.HIGHEST
    h = x
    for w, b in params[:-1]:
        y = jnp.dot(h, w.T, precision=hp) + b[:, 0]
        h = jnp.exp(-(y ** 2) / (2.0 * sigma ** 2))
    w, b = params[-1]
    return jnp.dot(h, w.T, precision=hp) + b[:, 0]


if __name__ == "__main__":
    # Small shapes consistent with the module: coordinate-style MLP.
    in_dims = 3
    hidden_dims = 32
    hidden_layers = 2
    out_dims = 4
    sigma = 0.1  # effective activation sigma (see NOTE in the header)

    key = jax.random.PRNGKey(0)
    kp, kx1, kx2 = jax.random.split(key, 3)
    params = init_garf_params(kp, in_dims, hidden_dims, hidden_layers, out_dims)

    # sigma=0.1 => exponent is -50*y^2, which amplifies tiny matmul-rounding
    # differences between the MXU and the XLA reference; use 1e-3 tolerances
    # (real layout/indexing bugs produce O(1) errors).
    tol = dict(atol=1e-3, rtol=1e-3)

    # Case 1: tiny batch (single full-extent block).
    x1 = jax.random.normal(kx1, (8, in_dims), dtype=jnp.float32)
    out1 = jax.block_until_ready(garf_forward(params, x1, sigma=sigma))
    ref1 = garf_reference(params, x1, sigma=sigma)
    assert out1.shape == (8, out_dims), out1.shape
    assert jnp.allclose(out1, ref1, **tol), (
        "Pallas output mismatch vs reference (case 1), max abs err = "
        f"{float(jnp.max(jnp.abs(out1 - ref1)))}")

    # Case 2: non-multiple batch with a small tile to exercise the multi-step
    # grid + edge-block masking path (no wrapper padding anywhere).
    x2 = jax.random.normal(kx2, (300, in_dims), dtype=jnp.float32)
    out2 = jax.block_until_ready(garf_forward(params, x2, sigma=sigma, tile_n=128))
    ref2 = garf_reference(params, x2, sigma=sigma)
    assert out2.shape == (300, out_dims), out2.shape
    assert jnp.allclose(out2, ref2, **tol), (
        "Pallas output mismatch vs reference (case 2), max abs err = "
        f"{float(jnp.max(jnp.abs(out2 - ref2)))}")

    print("KERNEL_OK")
</pallas_src>

<mosaic_0001>
module attributes {stable_mosaic.version = 11 : i64} {
  func.func @kernel(%arg0: i32, %arg1: memref<3x8xf32, #tpu.memory_space<vmem>>, %arg2: memref<32x3xf32, #tpu.memory_space<vmem>>, %arg3: memref<32x1xf32, #tpu.memory_space<vmem>>, %arg4: memref<32x32xf32, #tpu.memory_space<vmem>>, %arg5: memref<32x1xf32, #tpu.memory_space<vmem>>, %arg6: memref<32x32xf32, #tpu.memory_space<vmem>>, %arg7: memref<32x1xf32, #tpu.memory_space<vmem>>, %arg8: memref<4x32xf32, #tpu.memory_space<vmem>>, %arg9: memref<4x1xf32, #tpu.memory_space<vmem>>, %arg10: memref<4x8xf32, #tpu.memory_space<vmem>>) attributes {dimension_semantics = [#tpu.dimension_semantics<parallel>], iteration_bounds = array<i64: 1>, scalar_prefetch = 0 : i64, scratch_operands = 0 : i64, tpu.core_type = #tpu.core_type<tc>, window_params = [{transform_indices = @transform_0, window_bounds = array<i64: 3, 8>}, {pipeline_mode = #tpu.pipeline_mode<synchronous>, transform_indices = @transform_1, window_bounds = array<i64: 32, 3>}, {pipeline_mode = #tpu.pipeline_mode<synchronous>, transform_indices = @transform_2, window_bounds = array<i64: 32, 1>}, {pipeline_mode = #tpu.pipeline_mode<synchronous>, transform_indices = @transform_3, window_bounds = array<i64: 32, 32>}, {pipeline_mode = #tpu.pipeline_mode<synchronous>, transform_indices = @transform_4, window_bounds = array<i64: 32, 1>}, {pipeline_mode = #tpu.pipeline_mode<synchronous>, transform_indices = @transform_5, window_bounds = array<i64: 32, 32>}, {pipeline_mode = #tpu.pipeline_mode<synchronous>, transform_indices = @transform_6, window_bounds = array<i64: 32, 1>}, {pipeline_mode = #tpu.pipeline_mode<synchronous>, transform_indices = @transform_7, window_bounds = array<i64: 4, 32>}, {pipeline_mode = #tpu.pipeline_mode<synchronous>, transform_indices = @transform_8, window_bounds = array<i64: 4, 1>}, {transform_indices = @transform_9, window_bounds = array<i64: 4, 8>}]} {
    %c0 = arith.constant 0 : index
    %c0_0 = arith.constant 0 : index
    %0 = vector.load %arg1[%c0, %c0_0] : memref<3x8xf32, #tpu.memory_space<vmem>>, vector<3x8xf32>
    %c0_1 = arith.constant 0 : index
    %c0_2 = arith.constant 0 : index
    %1 = vector.load %arg2[%c0_1, %c0_2] : memref<32x3xf32, #tpu.memory_space<vmem>>, vector<32x3xf32>
    %c0_3 = arith.constant 0 : index
    %c0_4 = arith.constant 0 : index
    %2 = vector.load %arg3[%c0_3, %c0_4] : memref<32x1xf32, #tpu.memory_space<vmem>>, vector<32x1xf32>
    %cst = arith.constant dense<0.000000e+00> : vector<32x8xf32>
    %3 = tpu.matmul %1, %0, %cst {dimension_numbers = #tpu.dot_dimension_numbers<[1], [0], [0], [1], [0, 0, 1, 1], [], []>} : vector<32x3xf32>, vector<3x8xf32>, vector<32x8xf32> -> vector<32x8xf32>
    %4 = vector.broadcast %2 : vector<32x1xf32> to vector<32x8xf32>
    %5 = arith.addf %3, %4 : vector<32x8xf32>
    %6 = arith.mulf %5, %5 : vector<32x8xf32>
    %cst_5 = arith.constant -5.000000e+01 : f32
    %7 = vector.broadcast %cst_5 : f32 to vector<32x8xf32>
    %8 = arith.mulf %6, %7 : vector<32x8xf32>
    %9 = math.exp %8 : vector<32x8xf32>
    %c0_6 = arith.constant 0 : index
    %c0_7 = arith.constant 0 : index
    %10 = vector.load %arg4[%c0_6, %c0_7] : memref<32x32xf32, #tpu.memory_space<vmem>>, vector<32x32xf32>
    %c0_8 = arith.constant 0 : index
    %c0_9 = arith.constant 0 : index
    %11 = vector.load %arg5[%c0_8, %c0_9] : memref<32x1xf32, #tpu.memory_space<vmem>>, vector<32x1xf32>
    %cst_10 = arith.constant dense<0.000000e+00> : vector<32x8xf32>
    %12 = tpu.matmul %10, %9, %cst_10 {dimension_numbers = #tpu.dot_dimension_numbers<[1], [0], [0], [1], [0, 0, 1, 1], [], []>} : vector<32x32xf32>, vector<32x8xf32>, vector<32x8xf32> -> vector<32x8xf32>
    %13 = vector.broadcast %11 : vector<32x1xf32> to vector<32x8xf32>
    %14 = arith.addf %12, %13 : vector<32x8xf32>
    %15 = arith.mulf %14, %14 : vector<32x8xf32>
    %cst_11 = arith.constant -5.000000e+01 : f32
    %16 = vector.broadcast %cst_11 : f32 to vector<32x8xf32>
    %17 = arith.mulf %15, %16 : vector<32x8xf32>
    %18 = math.exp %17 : vector<32x8xf32>
    %c0_12 = arith.constant 0 : index
    %c0_13 = arith.constant 0 : index
    %19 = vector.load %arg6[%c0_12, %c0_13] : memref<32x32xf32, #tpu.memory_space<vmem>>, vector<32x32xf32>
    %c0_14 = arith.constant 0 : index
    %c0_15 = arith.constant 0 : index
    %20 = vector.load %arg7[%c0_14, %c0_15] : memref<32x1xf32, #tpu.memory_space<vmem>>, vector<32x1xf32>
    %cst_16 = arith.constant dense<0.000000e+00> : vector<32x8xf32>
    %21 = tpu.matmul %19, %18, %cst_16 {dimension_numbers = #tpu.dot_dimension_numbers<[1], [0], [0], [1], [0, 0, 1, 1], [], []>} : vector<32x32xf32>, vector<32x8xf32>, vector<32x8xf32> -> vector<32x8xf32>
    %22 = vector.broadcast %20 : vector<32x1xf32> to vector<32x8xf32>
    %23 = arith.addf %21, %22 : vector<32x8xf32>
    %24 = arith.mulf %23, %23 : vector<32x8xf32>
    %cst_17 = arith.constant -5.000000e+01 : f32
    %25 = vector.broadcast %cst_17 : f32 to vector<32x8xf32>
    %26 = arith.mulf %24, %25 : vector<32x8xf32>
    %27 = math.exp %26 : vector<32x8xf32>
    %c0_18 = arith.constant 0 : index
    %c0_19 = arith.constant 0 : index
    %28 = vector.load %arg8[%c0_18, %c0_19] : memref<4x32xf32, #tpu.memory_space<vmem>>, vector<4x32xf32>
    %c0_20 = arith.constant 0 : index
    %c0_21 = arith.constant 0 : index
    %29 = vector.load %arg9[%c0_20, %c0_21] : memref<4x1xf32, #tpu.memory_space<vmem>>, vector<4x1xf32>
    %cst_22 = arith.constant dense<0.000000e+00> : vector<4x8xf32>
    %30 = tpu.matmul %28, %27, %cst_22 {dimension_numbers = #tpu.dot_dimension_numbers<[1], [0], [0], [1], [0, 0, 1, 1], [], []>} : vector<4x32xf32>, vector<32x8xf32>, vector<4x8xf32> -> vector<4x8xf32>
    %31 = vector.broadcast %29 : vector<4x1xf32> to vector<4x8xf32>
    %32 = arith.addf %30, %31 : vector<4x8xf32>
    %c0_23 = arith.constant 0 : index
    %c0_24 = arith.constant 0 : index
    %33 = vector.load %arg10[%c0_23, %c0_24] : memref<4x8xf32, #tpu.memory_space<vmem>>, vector<4x8xf32>
    tpu.vector_store %arg10[%c0_23, %c0_24], %32 {strides = array<i32>} : memref<4x8xf32, #tpu.memory_space<vmem>>, vector<4x8xf32>,
    return
  }
  func.func @transform_0(%arg0: i32) -> (i32, i32) {
    %c0_i32 = arith.constant 0 : i32
    %c0_i32_0 = arith.constant 0 : i32
    return %c0_i32, %arg0 : i32, i32
  }
  func.func @transform_1(%arg0: i32) -> (i32, i32) {
    %c0_i32 = arith.constant 0 : i32
    %c0_i32_0 = arith.constant 0 : i32
    %c0_i32_1 = arith.constant 0 : i32
    return %c0_i32, %c0_i32_0 : i32, i32
  }
  func.func @transform_2(%arg0: i32) -> (i32, i32) {
    %c0_i32 = arith.constant 0 : i32
    %c0_i32_0 = arith.constant 0 : i32
    %c0_i32_1 = arith.constant 0 : i32
    return %c0_i32, %c0_i32_0 : i32, i32
  }
  func.func @transform_3(%arg0: i32) -> (i32, i32) {
    %c0_i32 = arith.constant 0 : i32
    %c0_i32_0 = arith.constant 0 : i32
    %c0_i32_1 = arith.constant 0 : i32
    return %c0_i32, %c0_i32_0 : i32, i32
  }
  func.func @transform_4(%arg0: i32) -> (i32, i32) {
    %c0_i32 = arith.constant 0 : i32
    %c0_i32_0 = arith.constant 0 : i32
    %c0_i32_1 = arith.constant 0 : i32
    return %c0_i32, %c0_i32_0 : i32, i32
  }
  func.func @transform_5(%arg0: i32) -> (i32, i32) {
    %c0_i32 = arith.constant 0 : i32
    %c0_i32_0 = arith.constant 0 : i32
    %c0_i32_1 = arith.constant 0 : i32
    return %c0_i32, %c0_i32_0 : i32, i32
  }
  func.func @transform_6(%arg0: i32) -> (i32, i32) {
    %c0_i32 = arith.constant 0 : i32
    %c0_i32_0 = arith.constant 0 : i32
    %c0_i32_1 = arith.constant 0 : i32
    return %c0_i32, %c0_i32_0 : i32, i32
  }
  func.func @transform_7(%arg0: i32) -> (i32, i32) {
    %c0_i32 = arith.constant 0 : i32
    %c0_i32_0 = arith.constant 0 : i32
    %c0_i32_1 = arith.constant 0 : i32
    return %c0_i32, %c0_i32_0 : i32, i32
  }
  func.func @transform_8(%arg0: i32) -> (i32, i32) {
    %c0_i32 = arith.constant 0 : i32
    %c0_i32_0 = arith.constant 0 : i32
    %c0_i32_1 = arith.constant 0 : i32
    return %c0_i32, %c0_i32_0 : i32, i32
  }
  func.func @transform_9(%arg0: i32) -> (i32, i32) {
    %c0_i32 = arith.constant 0 : i32
    %c0_i32_0 = arith.constant 0 : i32
    return %c0_i32, %arg0 : i32, i32
  }
}

</mosaic_0001>

<llo_original>
// kernel: tpu_custom_call.1
$region0: #{tpu_custom_call.1}
  #allocation0 [shape = 'u32[]', space=smem, size = 0x4, offset = 0x4, fixed_abs, tag = 'smem constant byte address 0x4 - core index']
  #allocation1 [shape = 'u32[144,128]{1,0:T(1,128)}', space=vmem, size = 0x12000, scoped, tag = 'internal scratch']
  %s0 = inlined_call_operand.vmem [shape: f32[3,8], index: 0, kind: input, shape index: {}]
  %s1 = inlined_call_operand.vmem [shape: f32[32,3], index: 1, kind: input, shape index: {}]
  %s2 = inlined_call_operand.vmem [shape: f32[32,1], index: 2, kind: input, shape index: {}]
  %s3 = inlined_call_operand.vmem [shape: f32[32,32], index: 3, kind: input, shape index: {}]
  %s4 = inlined_call_operand.vmem [shape: f32[32,1], index: 4, kind: input, shape index: {}]
  %s5 = inlined_call_operand.vmem [shape: f32[32,32], index: 5, kind: input, shape index: {}]
  %s6 = inlined_call_operand.vmem [shape: f32[32,1], index: 6, kind: input, shape index: {}]
  %s7 = inlined_call_operand.vmem [shape: f32[4,32], index: 7, kind: input, shape index: {}]
  %s8 = inlined_call_operand.vmem [shape: f32[4,1], index: 8, kind: input, shape index: {}]
  %s9 = inlined_call_operand.hbm [shape: f32[4,8], index: 9, kind: output, shape index: {}]
  %s10 = sld [smem:[#allocation0]]
  $region46: #{tpu_custom_call.1} parent=0
    _
  %s12 = ssub.s32 1, %s10
  %s13 = scalar_select 0, %s12, %s10
  $region1: #{tpu_custom_call.1} parent=0
    #allocation2 [shape = 'u8[2048]{0}', space=vmem, size = 0x800, scoped, tag = 'output window, operand 0, single buffered']
    #allocation3 [shape = 's32[1]{0}', space=sflag, size = 0x4, scoped, tag = 'scoped memory for tpu_custom_call.1']
    %14 = vsyncpa [#allocation3], 0
    // Predicated region
    $region2: #{tpu_custom_call.1} parent=1 // pred_check
      _
    $region3: #{tpu_custom_call.1} parent=1 // pred_check_branch
      %16 = sbr.rel (0) target = $region5
    $region4: #{tpu_custom_call.1} parent=1 // pred_region
      _
    $region5: #{tpu_custom_call.1} parent=1 // pred_fallthru
      _
    // Predicated region
    $region6: #{tpu_custom_call.1} parent=1 // pred_check
      _
    $region7: #{tpu_custom_call.1} parent=1 // pred_check_branch
      %18 = sbr.rel (0) target = $region9
    $region8: #{tpu_custom_call.1} parent=1 // pred_region
      _
    $region9: #{tpu_custom_call.1} parent=1 // pred_fallthru
      _
    // Predicated region
    $region10: #{tpu_custom_call.1} parent=1 // pred_check
      _
    $region11: #{tpu_custom_call.1} parent=1 // pred_check_branch
      %20 = sbr.rel (0) target = $region13
    $region12: #{tpu_custom_call.1} parent=1 // pred_region
      _
    $region13: #{tpu_custom_call.1} parent=1 // pred_fallthru
      _
    // Predicated region
    $region14: #{tpu_custom_call.1} parent=1 // pred_check
      _
    $region15: #{tpu_custom_call.1} parent=1 // pred_check_branch
      %22 = sbr.rel (0) target = $region17
    $region16: #{tpu_custom_call.1} parent=1 // pred_region
      _
    $region17: #{tpu_custom_call.1} parent=1 // pred_fallthru
      _
    // Predicated region
    $region18: #{tpu_custom_call.1} parent=1 // pred_check
      _
    $region19: #{tpu_custom_call.1} parent=1 // pred_check_branch
      %24 = sbr.rel (0) target = $region21
    $region20: #{tpu_custom_call.1} parent=1 // pred_region
      _
    $region21: #{tpu_custom_call.1} parent=1 // pred_fallthru
      _
    // Predicated region
    $region22: #{tpu_custom_call.1} parent=1 // pred_check
      _
    $region23: #{tpu_custom_call.1} parent=1 // pred_check_branch
      %26 = sbr.rel (0) target = $region25
    $region24: #{tpu_custom_call.1} parent=1 // pred_region
      _
    $region25: #{tpu_custom_call.1} parent=1 // pred_fallthru
      _
    // Predicated region
    $region26: #{tpu_custom_call.1} parent=1 // pred_check
      _
    $region27: #{tpu_custom_call.1} parent=1 // pred_check_branch
      %28 = sbr.rel (0) target = $region29
    $region28: #{tpu_custom_call.1} parent=1 // pred_region
      _
    $region29: #{tpu_custom_call.1} parent=1 // pred_fallthru
      _
    // Predicated region
    $region30: #{tpu_custom_call.1} parent=1 // pred_check
      _
    $region31: #{tpu_custom_call.1} parent=1 // pred_check_branch
      %30 = sbr.rel (0) target = $region33
    $region32: #{tpu_custom_call.1} parent=1 // pred_region
      _
    $region33: #{tpu_custom_call.1} parent=1 // pred_fallthru
      _
    // Predicated region
    $region34: #{tpu_custom_call.1} parent=1 // pred_check
      _
    $region35: #{tpu_custom_call.1} parent=1 // pred_check_branch
      %32 = sbr.rel (0) target = $region37
    $region36: #{tpu_custom_call.1} parent=1 // pred_region
      _
    $region37: #{tpu_custom_call.1} parent=1 // pred_fallthru
      _
    %v33 = vld [vmem:[%s0] sm:$0x7]
    %v34 = vld [vmem:[%s1] sm:$0xff]
    %v35 = vld [vmem:[%s1 + $0x8] sm:$0xff]
    %v36 = vld [vmem:[%s1 + $0x10] sm:$0xff]
    %v37 = vld [vmem:[%s1 + $0x18] sm:$0xff]
    %v38 = vld [vmem:[%s2] sm:$0xff]
    %v39 = vld [vmem:[%s2 + $0x8] sm:$0xff]
    %v40 = vld [vmem:[%s2 + $0x10] sm:$0xff]
    %v41 = vld [vmem:[%s2 + $0x18] sm:$0xff]
    %43 = vset.pattern.permute.xlu0 0
    %44 = vperm.xlu0 %43, %v38
    %v45 = vpop.permute.xlu0 %44
    %48 = vset.pattern.permute.xlu0 0
    %49 = vperm.xlu0 %48, %v39
    %v50 = vpop.permute.xlu0 %49
    %53 = vset.pattern.permute.xlu0 0
    %54 = vperm.xlu0 %53, %v40
    %v55 = vpop.permute.xlu0 %54
    %58 = vset.pattern.permute.xlu0 0
    %59 = vperm.xlu0 %58, %v41
    %v60 = vpop.permute.xlu0 %59
    %vm62 = vcmask 23552
    %v64 = vsel %vm62, %v34, 0
    %v67 = vsel %vm62, %v35, 0
    %v70 = vsel %vm62, %v36, 0
    %v73 = vsel %vm62, %v37, 0
    %vm75 = vcmask 1042432
    %v77 = vsel %vm75, %v33, 0
    %79 = vmatprep.subr.mxu0 0.0
    %80 = vmatpush1.msra.mxu0 %v77
    %81 = vmatprep.subr.mxu0 0.0
    %82 = vmatpush1.msra.mxu0 0.0
    %83 = vmatprep.subr.mxu0 0.0
    %84 = vmatpush1.msra.mxu0 0.0
    %85 = vmatprep.subr.mxu0 0.0
    %86 = vmatpush1.msra.mxu0 0.0
    %87 = vmatprep.subr.mxu0 0.0
    %88 = vmatpush1.msra.mxu0 0.0
    %89 = vmatprep.subr.mxu0 0.0
    %90 = vmatpush1.msra.mxu0 0.0
    %91 = vmatprep.subr.mxu0 0.0
    %92 = vmatpush1.msra.mxu0 0.0
    %93 = vmatprep.subr.mxu0 0.0
    %94 = vmatpush1.msra.mxu0 0.0
    %95 = vmatprep.subr.mxu0 0.0
    %96 = vmatpush1.msra.mxu0 0.0
    %97 = vmatprep.subr.mxu0 0.0
    %98 = vmatpush1.msra.mxu0 0.0
    %99 = vmatprep.subr.mxu0 0.0
    %100 = vmatpush1.msra.mxu0 0.0
    %101 = vmatprep.subr.mxu0 0.0
    %102 = vmatpush1.msra.mxu0 0.0
    %103 = vmatprep.subr.mxu0 0.0
    %104 = vmatpush1.msra.mxu0 0.0
    %105 = vmatprep.subr.mxu0 0.0
    %106 = vmatpush1.msra.mxu0 0.0
    %107 = vmatprep.subr.mxu0 0.0
    %108 = vmatpush1.msra.mxu0 0.0
    %109 = vmatprep.subr.mxu0 0.0
    %110 = vmatpush1.msra.mxu0 0.0
    %111 = vmatprep.subr.mxu0 0.0
    %112 = vmatpush1.msra.mxu0 0.0
    %113 = vmatprep.subr.mxu0 0.0
    %114 = vmatpush1.msra.mxu0 0.0
    %115 = vmatprep.subr.mxu0 0.0
    %116 = vmatpush1.msra.mxu0 0.0
    %117 = vmatprep.subr.mxu0 0.0
    %118 = vmatpush1.msra.mxu0 0.0
    %119 = vmatprep.subr.mxu0 0.0
    %120 = vmatpush1.msra.mxu0 0.0
    %121 = vmatprep.subr.mxu0 0.0
    %122 = vmatpush1.msra.mxu0 0.0
    %123 = vmatprep.subr.mxu0 0.0
    %124 = vmatpush1.msra.mxu0 0.0
    %125 = vmatprep.subr.mxu0 0.0
    %126 = vmatpush1.msra.mxu0 0.0
    %127 = vmatprep.subr.mxu0 0.0
    %128 = vmatpush1.msra.mxu0 0.0
    %129 = vmatprep.subr.mxu0 0.0
    %130 = vmatpush1.msra.mxu0 0.0
    %131 = vmatprep.subr.mxu0 0.0
    %132 = vmatpush1.msra.mxu0 0.0
    %133 = vmatprep.subr.mxu0 0.0
    %134 = vmatpush1.msra.mxu0 0.0
    %135 = vmatprep.subr.mxu0 0.0
    %136 = vmatpush1.msra.mxu0 0.0
    %137 = vmatprep.subr.mxu0 0.0
    %138 = vmatpush1.msra.mxu0 0.0
    %139 = vmatprep.subr.mxu0 0.0
    %140 = vmatpush1.msra.mxu0 0.0
    %141 = vmatprep.subr.mxu0 0.0
    %142 = vmatpush1.msra.mxu0 0.0
    %143 = vmatprep.mubr.f32.mxu0 0.0
    %144 = vmatmul.mubr.f32.gmra.mrb[0].mxu0 %v64
    %v145 = vpop.f32.mrb[0].mxu0
    %v146 = vadd.f32 %v45, %v145
    %v147 = vpop.f32.mrb[0].mxu0
    %148 = vmatprep.mubr.f32.mxu0 0.0
    %149 = vmatmul.mubr.f32.gmra.mrb[0].mxu0 %v67
    %v150 = vpop.f32.mrb[0].mxu0
    %v151 = vadd.f32 %v50, %v150
    %v152 = vpop.f32.mrb[0].mxu0
    %153 = vmatprep.mubr.f32.mxu0 0.0
    %154 = vmatmul.mubr.f32.gmra.mrb[0].mxu0 %v70
    %v155 = vpop.f32.mrb[0].mxu0
    %v156 = vadd.f32 %v55, %v155
    %v157 = vpop.f32.mrb[0].mxu0
    %158 = vmatprep.mubr.f32.mxu0 0.0
    %159 = vmatmul.mubr.f32.gmra.mrb[0].mxu0 %v73
    %v160 = vpop.f32.mrb[0].mxu0
    %v161 = vadd.f32 %v60, %v160
    %v162 = vpop.f32.mrb[0].mxu0
    %163 = vdwg.mxu0
    %v164 = vmul.f32 %v146, %v146
    %v165 = vmul.f32 %v151, %v151
    %v166 = vmul.f32 %v156, %v156
    %v167 = vmul.f32 %v161, %v161
    %v168 = vmul.f32 %v164, -50.0
    %v169 = vmul.f32 %v165, -50.0
    %v170 = vmul.f32 %v166, -50.0
    %v171 = vmul.f32 %v167, -50.0
    %v172 = vmul.f32 %v168, 1.442695
    %v173 = vpow.pop %v172
    %v174 = vmul.f32 %v169, 1.442695
    %v175 = vpow.pop %v174
    %v176 = vmul.f32 %v170, 1.442695
    %v177 = vpow.pop %v176
    %v178 = vmul.f32 %v171, 1.442695
    %v179 = vpow.pop %v178
    %v180 = vld [vmem:[%s3] sm:$0xff]
    %v181 = vld [vmem:[%s3 + $0x8] sm:$0xff]
    %v182 = vld [vmem:[%s3 + $0x10] sm:$0xff]
    %v183 = vld [vmem:[%s3 + $0x18] sm:$0xff]
    %v184 = vld [vmem:[%s4] sm:$0xff]
    %v185 = vld [vmem:[%s4 + $0x8] sm:$0xff]
    %v186 = vld [vmem:[%s4 + $0x10] sm:$0xff]
    %v187 = vld [vmem:[%s4 + $0x18] sm:$0xff]
    %189 = vset.pattern.permute.xlu0 0
    %190 = vperm.xlu0 %189, %v184
    %v191 = vpop.permute.xlu0 %190
    %194 = vset.pattern.permute.xlu0 0
    %195 = vperm.xlu0 %194, %v185
    %v196 = vpop.permute.xlu0 %195
    %199 = vset.pattern.permute.xlu0 0
    %200 = vperm.xlu0 %199, %v186
    %v201 = vpop.permute.xlu0 %200
    %204 = vset.pattern.permute.xlu0 0
    %205 = vperm.xlu0 %204, %v187
    %v206 = vpop.permute.xlu0 %205
    %vm208 = vcmask 261120
    %v210 = vsel %vm208, %v180, 0
    %v213 = vsel %vm208, %v181, 0
    %v216 = vsel %vm208, %v182, 0
    %v219 = vsel %vm208, %v183, 0
    %221 = vmatprep.subr.mxu0 0.0
    %222 = vmatpush1.msra.mxu0 %v173
    %223 = vmatprep.subr.mxu0 0.0
    %224 = vmatpush1.msra.mxu0 %v175
    %225 = vmatprep.subr.mxu0 0.0
    %226 = vmatpush1.msra.mxu0 %v177
    %227 = vmatprep.subr.mxu0 0.0
    %228 = vmatpush1.msra.mxu0 %v179
    %229 = vmatprep.subr.mxu0 0.0
    %230 = vmatpush1.msra.mxu0 0.0
    %231 = vmatprep.subr.mxu0 0.0
    %232 = vmatpush1.msra.mxu0 0.0
    %233 = vmatprep.subr.mxu0 0.0
    %234 = vmatpush1.msra.mxu0 0.0
    %235 = vmatprep.subr.mxu0 0.0
    %236 = vmatpush1.msra.mxu0 0.0
    %237 = vmatprep.subr.mxu0 0.0
    %238 = vmatpush1.msra.mxu0 0.0
    %239 = vmatprep.subr.mxu0 0.0
    %240 = vmatpush1.msra.mxu0 0.0
    %241 = vmatprep.subr.mxu0 0.0
    %242 = vmatpush1.msra.mxu0 0.0
    %243 = vmatprep.subr.mxu0 0.0
    %244 = vmatpush1.msra.mxu0 0.0
    %245 = vmatprep.subr.mxu0 0.0
    %246 = vmatpush1.msra.mxu0 0.0
    %247 = vmatprep.subr.mxu0 0.0
    %248 = vmatpush1.msra.mxu0 0.0
    %249 = vmatprep.subr.mxu0 0.0
    %250 = vmatpush1.msra.mxu0 0.0
    %251 = vmatprep.subr.mxu0 0.0
    %252 = vmatpush1.msra.mxu0 0.0
    %253 = vmatprep.subr.mxu0 0.0
    %254 = vmatpush1.msra.mxu0 0.0
    %255 = vmatprep.subr.mxu0 0.0
    %256 = vmatpush1.msra.mxu0 0.0
    %257 = vmatprep.subr.mxu0 0.0
    %258 = vmatpush1.msra.mxu0 0.0
    %259 = vmatprep.subr.mxu0 0.0
    %260 = vmatpush1.msra.mxu0 0.0
    %261 = vmatprep.subr.mxu0 0.0
    %262 = vmatpush1.msra.mxu0 0.0
    %263 = vmatprep.subr.mxu0 0.0
    %264 = vmatpush1.msra.mxu0 0.0
    %265 = vmatprep.subr.mxu0 0.0
    %266 = vmatpush1.msra.mxu0 0.0
    %267 = vmatprep.subr.mxu0 0.0
    %268 = vmatpush1.msra.mxu0 0.0
    %269 = vmatprep.subr.mxu0 0.0
    %270 = vmatpush1.msra.mxu0 0.0
    %271 = vmatprep.subr.mxu0 0.0
    %272 = vmatpush1.msra.mxu0 0.0
    %273 = vmatprep.subr.mxu0 0.0
    %274 = vmatpush1.msra.mxu0 0.0
    %275 = vmatprep.subr.mxu0 0.0
    %276 = vmatpush1.msra.mxu0 0.0
    %277 = vmatprep.subr.mxu0 0.0
    %278 = vmatpush1.msra.mxu0 0.0
    %279 = vmatprep.subr.mxu0 0.0
    %280 = vmatpush1.msra.mxu0 0.0
    %281 = vmatprep.subr.mxu0 0.0
    %282 = vmatpush1.msra.mxu0 0.0
    %283 = vmatprep.subr.mxu0 0.0
    %284 = vmatpush1.msra.mxu0 0.0
    %285 = vmatprep.mubr.f32.mxu0 0.0
    %286 = vmatmul.mubr.f32.gmra.mrb[0].mxu0 %v210
    %v287 = vpop.f32.mrb[0].mxu0
    %v288 = vadd.f32 %v191, %v287
    %v289 = vpop.f32.mrb[0].mxu0
    %290 = vmatprep.mubr.f32.mxu0 0.0
    %291 = vmatmul.mubr.f32.gmra.mrb[0].mxu0 %v213
    %v292 = vpop.f32.mrb[0].mxu0
    %v293 = vadd.f32 %v196, %v292
    %v294 = vpop.f32.mrb[0].mxu0
    %295 = vmatprep.mubr.f32.mxu0 0.0
    %296 = vmatmul.mubr.f32.gmra.mrb[0].mxu0 %v216
    %v297 = vpop.f32.mrb[0].mxu0
    %v298 = vadd.f32 %v201, %v297
    %v299 = vpop.f32.mrb[0].mxu0
    %300 = vmatprep.mubr.f32.mxu0 0.0
    %301 = vmatmul.mubr.f32.gmra.mrb[0].mxu0 %v219
    %v302 = vpop.f32.mrb[0].mxu0
    %v303 = vadd.f32 %v206, %v302
    %v304 = vpop.f32.mrb[0].mxu0
    %305 = vdwg.mxu0
    %v306 = vmul.f32 %v288, %v288
    %v307 = vmul.f32 %v293, %v293
    %v308 = vmul.f32 %v298, %v298
    %v309 = vmul.f32 %v303, %v303
    %v310 = vmul.f32 %v306, -50.0
    %v311 = vmul.f32 %v307, -50.0
    %v312 = vmul.f32 %v308, -50.0
    %v313 = vmul.f32 %v309, -50.0
    %v314 = vmul.f32 %v310, 1.442695
    %v315 = vpow.pop %v314
    %v316 = vmul.f32 %v311, 1.442695
    %v317 = vpow.pop %v316
    %v318 = vmul.f32 %v312, 1.442695
    %v319 = vpow.pop %v318
    %v320 = vmul.f32 %v313, 1.442695
    %v321 = vpow.pop %v320
    %v322 = vld [vmem:[%s5] sm:$0xff]
    %v323 = vld [vmem:[%s5 + $0x8] sm:$0xff]
    %v324 = vld [vmem:[%s5 + $0x10] sm:$0xff]
    %v325 = vld [vmem:[%s5 + $0x18] sm:$0xff]
    %v326 = vld [vmem:[%s6] sm:$0xff]
    %v327 = vld [vmem:[%s6 + $0x8] sm:$0xff]
    %v328 = vld [vmem:[%s6 + $0x10] sm:$0xff]
    %v329 = vld [vmem:[%s6 + $0x18] sm:$0xff]
    %331 = vset.pattern.permute.xlu0 0
    %332 = vperm.xlu0 %331, %v326
    %v333 = vpop.permute.xlu0 %332
    %336 = vset.pattern.permute.xlu0 0
    %337 = vperm.xlu0 %336, %v327
    %v338 = vpop.permute.xlu0 %337
    %341 = vset.pattern.permute.xlu0 0
    %342 = vperm.xlu0 %341, %v328
    %v343 = vpop.permute.xlu0 %342
    %346 = vset.pattern.permute.xlu0 0
    %347 = vperm.xlu0 %346, %v329
    %v348 = vpop.permute.xlu0 %347
    %v351 = vsel %vm208, %v322, 0
    %v354 = vsel %vm208, %v323, 0
    %v357 = vsel %vm208, %v324, 0
    %v360 = vsel %vm208, %v325, 0
    %362 = vmatprep.subr.mxu0 0.0
    %363 = vmatpush1.msra.mxu0 %v315
    %364 = vmatprep.subr.mxu0 0.0
    %365 = vmatpush1.msra.mxu0 %v317
    %366 = vmatprep.subr.mxu0 0.0
    %367 = vmatpush1.msra.mxu0 %v319
    %368 = vmatprep.subr.mxu0 0.0
    %369 = vmatpush1.msra.mxu0 %v321
    %370 = vmatprep.subr.mxu0 0.0
    %371 = vmatpush1.msra.mxu0 0.0
    %372 = vmatprep.subr.mxu0 0.0
    %373 = vmatpush1.msra.mxu0 0.0
    %374 = vmatprep.subr.mxu0 0.0
    %375 = vmatpush1.msra.mxu0 0.0
    %376 = vmatprep.subr.mxu0 0.0
    %377 = vmatpush1.msra.mxu0 0.0
    %378 = vmatprep.subr.mxu0 0.0
    %379 = vmatpush1.msra.mxu0 0.0
    %380 = vmatprep.subr.mxu0 0.0
    %381 = vmatpush1.msra.mxu0 0.0
    %382 = vmatprep.subr.mxu0 0.0
    %383 = vmatpush1.msra.mxu0 0.0
    %384 = vmatprep.subr.mxu0 0.0
    %385 = vmatpush1.msra.mxu0 0.0
    %386 = vmatprep.subr.mxu0 0.0
    %387 = vmatpush1.msra.mxu0 0.0
    %388 = vmatprep.subr.mxu0 0.0
    %389 = vmatpush1.msra.mxu0 0.0
    %390 = vmatprep.subr.mxu0 0.0
    %391 = vmatpush1.msra.mxu0 0.0
    %392 = vmatprep.subr.mxu0 0.0
    %393 = vmatpush1.msra.mxu0 0.0
    %394 = vmatprep.subr.mxu0 0.0
    %395 = vmatpush1.msra.mxu0 0.0
    %396 = vmatprep.subr.mxu0 0.0
    %397 = vmatpush1.msra.mxu0 0.0
    %398 = vmatprep.subr.mxu0 0.0
    %399 = vmatpush1.msra.mxu0 0.0
    %400 = vmatprep.subr.mxu0 0.0
    %401 = vmatpush1.msra.mxu0 0.0
    %402 = vmatprep.subr.mxu0 0.0
    %403 = vmatpush1.msra.mxu0 0.0
    %404 = vmatprep.subr.mxu0 0.0
    %405 = vmatpush1.msra.mxu0 0.0
    %406 = vmatprep.subr.mxu0 0.0
    %407 = vmatpush1.msra.mxu0 0.0
    %408 = vmatprep.subr.mxu0 0.0
    %409 = vmatpush1.msra.mxu0 0.0
    %410 = vmatprep.subr.mxu0 0.0
    %411 = vmatpush1.msra.mxu0 0.0
    %412 = vmatprep.subr.mxu0 0.0
    %413 = vmatpush1.msra.mxu0 0.0
    %414 = vmatprep.subr.mxu0 0.0
    %415 = vmatpush1.msra.mxu0 0.0
    %416 = vmatprep.subr.mxu0 0.0
    %417 = vmatpush1.msra.mxu0 0.0
    %418 = vmatprep.subr.mxu0 0.0
    %419 = vmatpush1.msra.mxu0 0.0
    %420 = vmatprep.subr.mxu0 0.0
    %421 = vmatpush1.msra.mxu0 0.0
    %422 = vmatprep.subr.mxu0 0.0
    %423 = vmatpush1.msra.mxu0 0.0
    %424 = vmatprep.subr.mxu0 0.0
    %425 = vmatpush1.msra.mxu0 0.0
    %426 = vmatprep.mubr.f32.mxu0 0.0
    %427 = vmatmul.mubr.f32.gmra.mrb[0].mxu0 %v351
    %v428 = vpop.f32.mrb[0].mxu0
    %v429 = vadd.f32 %v333, %v428
    %v430 = vpop.f32.mrb[0].mxu0
    %431 = vmatprep.mubr.f32.mxu0 0.0
    %432 = vmatmul.mubr.f32.gmra.mrb[0].mxu0 %v354
    %v433 = vpop.f32.mrb[0].mxu0
    %v434 = vadd.f32 %v338, %v433
    %v435 = vpop.f32.mrb[0].mxu0
    %436 = vmatprep.mubr.f32.mxu0 0.0
    %437 = vmatmul.mubr.f32.gmra.mrb[0].mxu0 %v357
    %v438 = vpop.f32.mrb[0].mxu0
    %v439 = vadd.f32 %v343, %v438
    %v440 = vpop.f32.mrb[0].mxu0
    %441 = vmatprep.mubr.f32.mxu0 0.0
    %442 = vmatmul.mubr.f32.gmra.mrb[0].mxu0 %v360
    %v443 = vpop.f32.mrb[0].mxu0
    %v444 = vadd.f32 %v348, %v443
    %v445 = vpop.f32.mrb[0].mxu0
    %446 = vdwg.mxu0
    %v447 = vmul.f32 %v429, %v429
    %v448 = vmul.f32 %v434, %v434
    %v449 = vmul.f32 %v439, %v439
    %v450 = vmul.f32 %v444, %v444
    %v451 = vmul.f32 %v447, -50.0
    %v452 = vmul.f32 %v448, -50.0
    %v453 = vmul.f32 %v449, -50.0
    %v454 = vmul.f32 %v450, -50.0
    %v455 = vmul.f32 %v451, 1.442695
    %v456 = vpow.pop %v455
    %v457 = vmul.f32 %v452, 1.442695
    %v458 = vpow.pop %v457
    %v459 = vmul.f32 %v453, 1.442695
    %v460 = vpow.pop %v459
    %v461 = vmul.f32 %v454, 1.442695
    %v462 = vpow.pop %v461
    %v463 = vld [vmem:[%s7] sm:$0xf]
    %v464 = vld [vmem:[%s8] sm:$0xf]
    %466 = vset.pattern.permute.xlu0 0
    %467 = vperm.xlu0 %466, %v464
    %v468 = vpop.permute.xlu0 %467
    %v471 = vsel %vm208, %v463, 0
    %473 = vmatprep.subr.mxu0 0.0
    %474 = vmatpush1.msra.mxu0 %v456
    %475 = vmatprep.subr.mxu0 0.0
    %476 = vmatpush1.msra.mxu0 %v458
    %477 = vmatprep.subr.mxu0 0.0
    %478 = vmatpush1.msra.mxu0 %v460
    %479 = vmatprep.subr.mxu0 0.0
    %480 = vmatpush1.msra.mxu0 %v462
    %481 = vmatprep.subr.mxu0 0.0
    %482 = vmatpush1.msra.mxu0 0.0
    %483 = vmatprep.subr.mxu0 0.0
    %484 = vmatpush1.msra.mxu0 0.0
    %485 = vmatprep.subr.mxu0 0.0
    %486 = vmatpush1.msra.mxu0 0.0
    %487 = vmatprep.subr.mxu0 0.0
    %488 = vmatpush1.msra.mxu0 0.0
    %489 = vmatprep.subr.mxu0 0.0
    %490 = vmatpush1.msra.mxu0 0.0
    %491 = vmatprep.subr.mxu0 0.0
    %492 = vmatpush1.msra.mxu0 0.0
    %493 = vmatprep.subr.mxu0 0.0
    %494 = vmatpush1.msra.mxu0 0.0
    %495 = vmatprep.subr.mxu0 0.0
    %496 = vmatpush1.msra.mxu0 0.0
    %497 = vmatprep.subr.mxu0 0.0
    %498 = vmatpush1.msra.mxu0 0.0
    %499 = vmatprep.subr.mxu0 0.0
    %500 = vmatpush1.msra.mxu0 0.0
    %501 = vmatprep.subr.mxu0 0.0
    %502 = vmatpush1.msra.mxu0 0.0
    %503 = vmatprep.subr.mxu0 0.0
    %504 = vmatpush1.msra.mxu0 0.0
    %505 = vmatprep.subr.mxu0 0.0
    %506 = vmatpush1.msra.mxu0 0.0
    %507 = vmatprep.subr.mxu0 0.0
    %508 = vmatpush1.msra.mxu0 0.0
    %509 = vmatprep.subr.mxu0 0.0
    %510 = vmatpush1.msra.mxu0 0.0
    %511 = vmatprep.subr.mxu0 0.0
    %512 = vmatpush1.msra.mxu0 0.0
    %513 = vmatprep.subr.mxu0 0.0
    %514 = vmatpush1.msra.mxu0 0.0
    %515 = vmatprep.subr.mxu0 0.0
    %516 = vmatpush1.msra.mxu0 0.0
    %517 = vmatprep.subr.mxu0 0.0
    %518 = vmatpush1.msra.mxu0 0.0
    %519 = vmatprep.subr.mxu0 0.0
    %520 = vmatpush1.msra.mxu0 0.0
    %521 = vmatprep.subr.mxu0 0.0
    %522 = vmatpush1.msra.mxu0 0.0
    %523 = vmatprep.subr.mxu0 0.0
    %524 = vmatpush1.msra.mxu0 0.0
    %525 = vmatprep.subr.mxu0 0.0
    %526 = vmatpush1.msra.mxu0 0.0
    %527 = vmatprep.subr.mxu0 0.0
    %528 = vmatpush1.msra.mxu0 0.0
    %529 = vmatprep.subr.mxu0 0.0
    %530 = vmatpush1.msra.mxu0 0.0
    %531 = vmatprep.subr.mxu0 0.0
    %532 = vmatpush1.msra.mxu0 0.0
    %533 = vmatprep.subr.mxu0 0.0
    %534 = vmatpush1.msra.mxu0 0.0
    %535 = vmatprep.subr.mxu0 0.0
    %536 = vmatpush1.msra.mxu0 0.0
    %537 = vmatprep.mubr.f32.mxu0 0.0
    %538 = vmatmul.mubr.f32.gmra.mrb[0].mxu0 %v471
    %v539 = vpop.f32.mrb[0].mxu0
    %v540 = vadd.f32 %v468, %v539
    %v541 = vpop.f32.mrb[0].mxu0
    %542 = vdwg.mxu0
    %vm543 = vcmask 60416
    %544 = vst.msk [vmem:[#allocation2] sm:$0xf] %vm543, %v540
    // Predicated region
    $region38: #{tpu_custom_call.1} parent=1 // pred_check
      _
    $region39: #{tpu_custom_call.1} parent=1 // pred_check_branch
      %546 = sbr.rel (0) target = $region41
    $region40: #{tpu_custom_call.1} parent=1 // pred_region
      %s548 = ssub.s32 64, 64
      %549 = vsyncadd [#allocation3], %s548
      %s551 = sshll.u32 [#allocation2], 4
      %s552 = int_to_ptr.vmem [resolvable:$true] %s551
      %554 = dma.vmem_to_hbm [thread:$0]  %s552, 64, %s9, [#allocation3]
    $region41: #{tpu_custom_call.1} parent=1 // pred_fallthru
      _
    // Predicated region
    $region42: #{tpu_custom_call.1} parent=1 // pred_check
      _
    $region43: #{tpu_custom_call.1} parent=1 // pred_check_branch
      %556 = sbr.rel (0) target = $region45
    $region44: #{tpu_custom_call.1} parent=1 // pred_region
      %557 = dma.done [#allocation3], 64
    $region45: #{tpu_custom_call.1} parent=1 // pred_fallthru
      _
    %558 = vsyncpa [#allocation3], 1

</llo_original>
